<compile_context>
chip_gen: v6e
topology: v6e:2x2x1
jax: 0.10.0
libtpu: 0.0.40
codegen_flags: <defaults>
</compile_context>

<pallas_src>
import jax
import jax.numpy as jnp
from jax.experimental import pallas as pl
from jax.experimental.pallas import tpu as pltpu


def _round_up(x: int, m: int) -> int:
    return ((x + m - 1) // m) * m


def _vmem_budget(nbytes: int) -> int:
    # Explicit scoped-VMEM budget: 2x the computed live footprint, floored at
    # 32 MiB and capped at 64 MiB so the same choice is valid on v5e/v6e
    # (128 MiB physical) and v7x (64 MiB physical).
    return int(min(64 * 2**20, max(32 * 2**20, 2 * nbytes)))


# ---------------------------------------------------------------------------
# Pass A: edge messages   msg = (B_1^T @ x_0) @ Theta
# grid = (E_tiles, N_tiles); node axis is the reduction ("arbitrary", last).
# ---------------------------------------------------------------------------
def _edge_msg_kernel(b1t_ref, x0_ref, w_ref, msg_ref, acc_ref):
    k = pl.program_id(1)

    @pl.when(k == 0)
    def _():
        acc_ref[...] = jnp.zeros_like(acc_ref)

    # (tE, tN) @ (tN, C_in) -> (tE, C_in), f32 accumulation on the MXU.
    acc_ref[...] += jnp.dot(
        b1t_ref[...], x0_ref[...], preferred_element_type=jnp.float32
    )

    @pl.when(k == pl.num_programs(1) - 1)
    def _():
        # Apply Theta once per finished edge tile.
        msg_ref[...] = jnp.dot(
            acc_ref[...], w_ref[...], preferred_element_type=jnp.float32
        ).astype(msg_ref.dtype)


# ---------------------------------------------------------------------------
# Pass B: node aggregation   out = B_1 @ msg
# grid = (N_tiles, E_tiles); edge axis is the reduction ("arbitrary", last).
# ---------------------------------------------------------------------------
def _node_agg_kernel(b1_ref, msg_ref, out_ref, acc_ref):
    k = pl.program_id(1)

    @pl.when(k == 0)
    def _():
        acc_ref[...] = jnp.zeros_like(acc_ref)

    acc_ref[...] += jnp.dot(
        b1_ref[...], msg_ref[...], preferred_element_type=jnp.float32
    )

    @pl.when(k == pl.num_programs(1) - 1)
    def _():
        out_ref[...] = acc_ref[...].astype(out_ref.dtype)


def unigcn_layer(
    x_0,
    incidence_1,
    weight,
    *,
    tile_nodes: int = 512,
    tile_edges: int = 512,
    incidence_dtype=jnp.bfloat16,
):
    """UniGCNLayer forward: out = B_1 @ ((B_1^T @ x_0) @ Theta).

    x_0         : (n_nodes, in_channels)
    incidence_1 : (n_nodes, n_edges) dense incidence matrix B_1 (binary)
    weight      : (in_channels, out_channels) Theta of conv_level2_1_to_0
    """
    if x_0.shape[0] != incidence_1.shape[0]:
        raise ValueError(
            f"Mismatch in number of nodes: {x_0.shape[0]} vs {incidence_1.shape[0]}."
        )

    n_nodes, c_in = x_0.shape
    n_edges = incidence_1.shape[1]
    c_out = weight.shape[1]
    out_dtype = x_0.dtype
    f32 = jnp.float32

    # ---- Tile selection / padding (lane-dense, MXU-aligned: multiples of 128).
    tn = min(tile_nodes, _round_up(n_nodes, 128))
    te = min(tile_edges, _round_up(n_edges, 128))
    n_pad = _round_up(n_nodes, tn)
    e_pad = _round_up(n_edges, te)
    ci_pad = _round_up(c_in, 128)
    co_pad = _round_up(c_out, 128)

    # Binary incidence -> bf16 cast is exact; zero padding is exact for matmul.
    b1 = (
        jnp.zeros((n_pad, e_pad), incidence_dtype)
        .at[:n_nodes, :n_edges]
        .set(incidence_1.astype(incidence_dtype))
    )
    b1t = b1.T  # transpose once in HBM; both kernels feed the MXU K-major.
    x0 = jnp.zeros((n_pad, ci_pad), f32).at[:n_nodes, :c_in].set(x_0.astype(f32))
    w = jnp.zeros((ci_pad, co_pad), f32).at[:c_in, :c_out].set(weight.astype(f32))

    b1_item = jnp.dtype(incidence_dtype).itemsize

    # ------------------------------ Pass A ---------------------------------
    grid_a = (e_pad // te, n_pad // tn)
    flops_a = 2 * e_pad * n_pad * ci_pad + 2 * e_pad * ci_pad * co_pad
    bytes_a = (
        e_pad * n_pad * b1_item
        + grid_a[0] * n_pad * ci_pad * 4
        + ci_pad * co_pad * 4
        + e_pad * co_pad * 4
    )
    vmem_a = (
        2 * te * tn * b1_item       # double-buffered B_1^T tile
        + 2 * tn * ci_pad * 4       # double-buffered x_0 tile
        + 2 * ci_pad * co_pad * 4   # Theta (resident)
        + 2 * te * co_pad * 4       # double-buffered msg output tile
        + te * ci_pad * 4           # f32 accumulator
    )

    msg = pl.pallas_call(
        _edge_msg_kernel,
        out_shape=jax.ShapeDtypeStruct((e_pad, co_pad), f32),
        grid_spec=pltpu.PrefetchScalarGridSpec(
            num_scalar_prefetch=0,
            grid=grid_a,
            in_specs=[
                pl.BlockSpec((te, tn), lambda i, k: (i, k)),        # B_1^T
                pl.BlockSpec((tn, ci_pad), lambda i, k: (k, 0)),    # x_0
                pl.BlockSpec((ci_pad, co_pad), lambda i, k: (0, 0)),  # Theta
            ],
            out_specs=pl.BlockSpec((te, co_pad), lambda i, k: (i, 0)),
            scratch_shapes=[pltpu.VMEM((te, ci_pad), jnp.float32)],
        ),
        compiler_params=pltpu.CompilerParams(
            dimension_semantics=("parallel", "arbitrary"),
            vmem_limit_bytes=_vmem_budget(vmem_a),
        ),
        cost_estimate=pl.CostEstimate(
            flops=flops_a, transcendentals=0, bytes_accessed=bytes_a
        ),
    )(b1t, x0, w)

    # ------------------------------ Pass B ---------------------------------
    grid_b = (n_pad // tn, e_pad // te)
    flops_b = 2 * n_pad * e_pad * co_pad
    bytes_b = (
        n_pad * e_pad * b1_item
        + grid_b[0] * e_pad * co_pad * 4
        + n_pad * co_pad * 4
    )
    vmem_b = (
        2 * tn * te * b1_item       # double-buffered B_1 tile
        + 2 * te * co_pad * 4       # double-buffered msg tile
        + 2 * tn * co_pad * 4       # double-buffered output tile
        + tn * co_pad * 4           # f32 accumulator
    )

    out = pl.pallas_call(
        _node_agg_kernel,
        out_shape=jax.ShapeDtypeStruct((n_pad, co_pad), out_dtype),
        grid_spec=pltpu.PrefetchScalarGridSpec(
            num_scalar_prefetch=0,
            grid=grid_b,
            in_specs=[
                pl.BlockSpec((tn, te), lambda i, k: (i, k)),        # B_1
                pl.BlockSpec((te, co_pad), lambda i, k: (k, 0)),    # msg
            ],
            out_specs=pl.BlockSpec((tn, co_pad), lambda i, k: (i, 0)),
            scratch_shapes=[pltpu.VMEM((tn, co_pad), jnp.float32)],
        ),
        compiler_params=pltpu.CompilerParams(
            dimension_semantics=("parallel", "arbitrary"),
            vmem_limit_bytes=_vmem_budget(vmem_b),
        ),
        cost_estimate=pl.CostEstimate(
            flops=flops_b, transcendentals=0, bytes_accessed=bytes_b
        ),
    )(b1, msg)

    return out[:n_nodes, :c_out]


if __name__ == "__main__":
    # Small, deterministic problem.
    n_nodes, n_edges = 64, 24
    in_channels, out_channels = 32, 32

    key = jax.random.PRNGKey(0)
    k_x, k_b, k_w = jax.random.split(key, 3)

    x_0 = jax.random.normal(k_x, (n_nodes, in_channels), dtype=jnp.float32)
    # Binary incidence matrix B_1 (dense float32), like a sparse hypergraph incidence.
    incidence_1 = (jax.random.uniform(k_b, (n_nodes, n_edges)) < 0.3).astype(
        jnp.float32
    )
    # Theta of conv_level2_1_to_0 (xavier-style scale, deterministic).
    limit = (6.0 / (in_channels + out_channels)) ** 0.5
    weight = jax.random.uniform(
        k_w,
        (in_channels, out_channels),
        minval=-limit,
        maxval=limit,
        dtype=jnp.float32,
    )

    out = unigcn_layer(x_0, incidence_1, weight)
    out = jax.block_until_ready(out)

    # Pure-JAX reference of the same forward pass.
    ref = incidence_1 @ ((incidence_1.T @ x_0) @ weight)
    assert out.shape == (n_nodes, out_channels)
    assert jnp.allclose(out, ref, atol=1e-4, rtol=1e-4)

    print("KERNEL_OK")
</pallas_src>

<mosaic_0001>
module attributes {stable_mosaic.version = 11 : i64} {
  func.func @_edge_msg_kernel(%arg0: i32, %arg1: i32, %arg2: memref<128x128xbf16, #tpu.memory_space<vmem>>, %arg3: memref<128x128xf32, #tpu.memory_space<vmem>>, %arg4: memref<128x128xf32, #tpu.memory_space<vmem>>, %arg5: memref<128x128xf32, #tpu.memory_space<vmem>>, %arg6: memref<128x128xf32, #tpu.memory_space<vmem>>) attributes {dimension_semantics = [#tpu.dimension_semantics<parallel>, #tpu.dimension_semantics<arbitrary>], iteration_bounds = array<i64: 1, 1>, scalar_prefetch = 0 : i64, scratch_operands = 1 : i64, tpu.core_type = #tpu.core_type<tc>, window_params = [{transform_indices = @transform_0, window_bounds = array<i64: 128, 128>}, {transform_indices = @transform_1, window_bounds = array<i64: 128, 128>}, {pipeline_mode = #tpu.pipeline_mode<synchronous>, transform_indices = @transform_2, window_bounds = array<i64: 128, 128>}, {transform_indices = @transform_3, window_bounds = array<i64: 128, 128>}]} {
    %c0_i32 = arith.constant 0 : i32
    %0 = arith.cmpi eq, %arg1, %c0_i32 : i32
    %1 = arith.extui %0 : i1 to i32
    %c0_i32_0 = arith.constant 0 : i32
    %2 = arith.cmpi ne, %1, %c0_i32_0 : i32
    scf.if %2 {
      %cst_10 = arith.constant 0.000000e+00 : f32
      %12 = vector.broadcast %cst_10 : f32 to vector<128x128xf32>
      %c0_11 = arith.constant 0 : index
      %c0_12 = arith.constant 0 : index
      %13 = vector.load %arg6[%c0_11, %c0_12] : memref<128x128xf32, #tpu.memory_space<vmem>>, vector<128x128xf32>
      tpu.vector_store %arg6[%c0_11, %c0_12], %12 {strides = array<i32>} : memref<128x128xf32, #tpu.memory_space<vmem>>, vector<128x128xf32>,
    } else {
    }
    %c0 = arith.constant 0 : index
    %c0_1 = arith.constant 0 : index
    %3 = vector.load %arg6[%c0, %c0_1] : memref<128x128xf32, #tpu.memory_space<vmem>>, vector<128x128xf32>
    %c0_2 = arith.constant 0 : index
    %c0_3 = arith.constant 0 : index
    %4 = vector.load %arg2[%c0_2, %c0_3] : memref<128x128xbf16, #tpu.memory_space<vmem>>, vector<128x128xbf16>
    %c0_4 = arith.constant 0 : index
    %c0_5 = arith.constant 0 : index
    %5 = vector.load %arg3[%c0_4, %c0_5] : memref<128x128xf32, #tpu.memory_space<vmem>>, vector<128x128xf32>
    %cst = arith.constant dense<0.000000e+00> : vector<128x128xf32>
    %6 = tpu.matmul %4, %5, %cst {dimension_numbers = #tpu.dot_dimension_numbers<[1], [0], [0], [1], [0, 0, 1, 1], [], []>} : vector<128x128xbf16>, vector<128x128xf32>, vector<128x128xf32> -> vector<128x128xf32>
    %7 = arith.addf %3, %6 : vector<128x128xf32>
    %c0_6 = arith.constant 0 : index
    %c0_7 = arith.constant 0 : index
    %8 = vector.load %arg6[%c0_6, %c0_7] : memref<128x128xf32, #tpu.memory_space<vmem>>, vector<128x128xf32>
    tpu.vector_store %arg6[%c0_6, %c0_7], %7 {strides = array<i32>} : memref<128x128xf32, #tpu.memory_space<vmem>>, vector<128x128xf32>,
    %c0_i32_8 = arith.constant 0 : i32
    %9 = arith.cmpi eq, %arg1, %c0_i32_8 : i32
    %10 = arith.extui %9 : i1 to i32
    %c0_i32_9 = arith.constant 0 : i32
    %11 = arith.cmpi ne, %10, %c0_i32_9 : i32
    scf.if %11 {
      %c0_10 = arith.constant 0 : index
      %c0_11 = arith.constant 0 : index
      %12 = vector.load %arg6[%c0_10, %c0_11] : memref<128x128xf32, #tpu.memory_space<vmem>>, vector<128x128xf32>
      %c0_12 = arith.constant 0 : index
      %c0_13 = arith.constant 0 : index
      %13 = vector.load %arg4[%c0_12, %c0_13] : memref<128x128xf32, #tpu.memory_space<vmem>>, vector<128x128xf32>
      %cst_14 = arith.constant dense<0.000000e+00> : vector<128x128xf32>
      %14 = tpu.matmul %12, %13, %cst_14 {dimension_numbers = #tpu.dot_dimension_numbers<[1], [0], [0], [1], [0, 0, 1, 1], [], []>} : vector<128x128xf32>, vector<128x128xf32>, vector<128x128xf32> -> vector<128x128xf32>
      %c0_15 = arith.constant 0 : index
      %c0_16 = arith.constant 0 : index
      %15 = vector.load %arg5[%c0_15, %c0_16] : memref<128x128xf32, #tpu.memory_space<vmem>>, vector<128x128xf32>
      tpu.vector_store %arg5[%c0_15, %c0_16], %14 {strides = array<i32>} : memref<128x128xf32, #tpu.memory_space<vmem>>, vector<128x128xf32>,
    } else {
    }
    return
  }
  func.func @transform_0(%arg0: i32, %arg1: i32) -> (i32, i32) {
    %c0_i32 = arith.constant 0 : i32
    return %arg0, %arg1 : i32, i32
  }
  func.func @transform_1(%arg0: i32, %arg1: i32) -> (i32, i32) {
    %c0_i32 = arith.constant 0 : i32
    %c0_i32_0 = arith.constant 0 : i32
    return %arg1, %c0_i32 : i32, i32
  }
  func.func @transform_2(%arg0: i32, %arg1: i32) -> (i32, i32) {
    %c0_i32 = arith.constant 0 : i32
    %c0_i32_0 = arith.constant 0 : i32
    %c0_i32_1 = arith.constant 0 : i32
    return %c0_i32, %c0_i32_0 : i32, i32
  }
  func.func @transform_3(%arg0: i32, %arg1: i32) -> (i32, i32) {
    %c0_i32 = arith.constant 0 : i32
    %c0_i32_0 = arith.constant 0 : i32
    return %arg0, %c0_i32 : i32, i32
  }
}

</mosaic_0001>

<llo_original>
// kernel: tpu_custom_call.1
$region0: #{tpu_custom_call.1}
  #allocation0 [shape = 'u32[]', space=smem, size = 0x4, offset = 0x4, fixed_abs, tag = 'smem constant byte address 0x4 - core index']
  #allocation1 [shape = 'u32[144,128]{1,0:T(1,128)}', space=vmem, size = 0x12000, scoped, tag = 'internal scratch']
  #allocation2 [shape = 'f32[128,128]{1,0:T(8,128)}', space=vmem, size = 0x10000, scoped, tag = 'scratch operand']
  %s0 = inlined_call_operand.hbm [shape: bf16[128,128], index: 0, kind: input, shape index: {}]
  %s1 = inlined_call_operand.hbm [shape: f32[128,128], index: 1, kind: input, shape index: {}]
  %s2 = inlined_call_operand.hbm [shape: f32[128,128], index: 2, kind: input, shape index: {}]
  %s3 = inlined_call_operand.hbm [shape: f32[128,128], index: 3, kind: output, shape index: {}]
  %s4 = sld [smem:[#allocation0]]
  $region42: #{tpu_custom_call.1} parent=0
    _
  %s6 = ssub.s32 1, %s4
  %s7 = scalar_select 0, %s6, %s4
  $region1: #{tpu_custom_call.1} parent=0
    #allocation3 [shape = 'u8[32768]{0}', space=vmem, size = 0x8000, scoped, tag = 'input window, operand 0, single buffered']
    #allocation4 [shape = 's32[1]{0}', space=sflag, size = 0x4, scoped, tag = 'scoped memory for tpu_custom_call.1']
    #allocation5 [shape = 's32[1]{0}', space=sflag, size = 0x4, scoped, tag = 'scoped memory for tpu_custom_call.1']
    #allocation6 [shape = 'u8[65536]{0}', space=vmem, size = 0x10000, scoped, tag = 'input window, operand 1, single buffered']
    #allocation7 [shape = 's32[1]{0}', space=sflag, size = 0x4, scoped, tag = 'scoped memory for tpu_custom_call.1']
    #allocation8 [shape = 'u8[65536]{0}', space=vmem, size = 0x10000, scoped, tag = 'input window, operand 2, single buffered']
    #allocation9 [shape = 'u8[65536]{0}', space=vmem, size = 0x10000, scoped, tag = 'output window, operand 0, single buffered']
    %8 = vsyncpa [#allocation4], 0
    %9 = vsyncpa [#allocation7], 0
    %10 = vsyncpa [#allocation5], 0
    // Predicated region
    $region2: #{tpu_custom_call.1} parent=1 // pred_check
      _
    $region3: #{tpu_custom_call.1} parent=1 // pred_check_branch
      %12 = sbr.rel (0) target = $region5
    $region4: #{tpu_custom_call.1} parent=1 // pred_region
      %s14 = ssub.s32 1024, 1024
      %15 = vsyncadd [#allocation4], %s14
      %s16 = sshll.u32 [#allocation3], 4
      %s17 = int_to_ptr.vmem [resolvable:$true] %s16
      %22 = dma.hbm_to_vmem [thread:$0]  %s0, 1024, %s17, [#allocation4], 64, 64, 4
    $region5: #{tpu_custom_call.1} parent=1 // pred_fallthru
      _
    // Predicated region
    $region6: #{tpu_custom_call.1} parent=1 // pred_check
      _
    $region7: #{tpu_custom_call.1} parent=1 // pred_check_branch
      %24 = sbr.rel (0) target = $region9
    $region8: #{tpu_custom_call.1} parent=1 // pred_region
      %s26 = ssub.s32 2048, 2048
      %27 = vsyncadd [#allocation7], %s26
      %s28 = sshll.u32 [#allocation6], 4
      %s29 = int_to_ptr.vmem [resolvable:$true] %s28
      %34 = dma.hbm_to_vmem [thread:$0]  %s1, 2048, %s29, [#allocation7], 128, 128, 8
    $region9: #{tpu_custom_call.1} parent=1 // pred_fallthru
      _
    // Predicated region
    $region10: #{tpu_custom_call.1} parent=1 // pred_check
      _
    $region11: #{tpu_custom_call.1} parent=1 // pred_check_branch
      %36 = sbr.rel (0) target = $region13
    $region12: #{tpu_custom_call.1} parent=1 // pred_region
      %s38 = ssub.s32 2048, 2048
      %39 = vsyncadd [#allocation7], %s38
      %s40 = sshll.u32 [#allocation8], 4
      %s41 = int_to_ptr.vmem [resolvable:$true] %s40
      %46 = dma.hbm_to_vmem [thread:$0]  %s2, 2048, %s41, [#allocation7], 128, 128, 8
    $region13: #{tpu_custom_call.1} parent=1 // pred_fallthru
      _
    // Predicated region
    $region14: #{tpu_custom_call.1} parent=1 // pred_check
      _
    $region15: #{tpu_custom_call.1} parent=1 // pred_check_branch
      %48 = sbr.rel (0) target = $region17
    $region16: #{tpu_custom_call.1} parent=1 // pred_region
      %49 = dma.done [#allocation4], 1024
    $region17: #{tpu_custom_call.1} parent=1 // pred_fallthru
      _
    // Predicated region
    $region18: #{tpu_custom_call.1} parent=1 // pred_check
      _
    $region19: #{tpu_custom_call.1} parent=1 // pred_check_branch
      %51 = sbr.rel (0) target = $region21
    $region20: #{tpu_custom_call.1} parent=1 // pred_region
      %52 = dma.done [#allocation7], 2048
    $region21: #{tpu_custom_call.1} parent=1 // pred_fallthru
      _
    // Predicated region
    $region22: #{tpu_custom_call.1} parent=1 // pred_check
      _
    $region23: #{tpu_custom_call.1} parent=1 // pred_check_branch
      %54 = sbr.rel (0) target = $region25
    $region24: #{tpu_custom_call.1} parent=1 // pred_region
      %55 = dma.done [#allocation7], 2048
    $region25: #{tpu_custom_call.1} parent=1 // pred_fallthru
      _
    %p57 = scmp.eq.s32.totalorder 0, 0
    // Predicated region
    $region26: #{tpu_custom_call.1} parent=1 // pred_check
      %p58 = pneg %p57
    $region27: #{tpu_custom_call.1} parent=1 // pred_check_branch
      %60 = sbr.rel (%p58) target = $region29
    $region28: #{tpu_custom_call.1} parent=1 // pred_region
      %61 = vst [vmem:[#allocation2] sm:$0xff] 0.0
      %62 = vst [vmem:[#allocation2 + $0x8] sm:$0xff] 0.0
      %63 = vst [vmem:[#allocation2 + $0x10] sm:$0xff] 0.0
      %64 = vst [vmem:[#allocation2 + $0x18] sm:$0xff] 0.0
      %65 = vst [vmem:[#allocation2 + $0x20] sm:$0xff] 0.0
      %66 = vst [vmem:[#allocation2 + $0x28] sm:$0xff] 0.0
      %67 = vst [vmem:[#allocation2 + $0x30] sm:$0xff] 0.0
      %68 = vst [vmem:[#allocation2 + $0x38] sm:$0xff] 0.0
      %69 = vst [vmem:[#allocation2 + $0x40] sm:$0xff] 0.0
      %70 = vst [vmem:[#allocation2 + $0x48] sm:$0xff] 0.0
      %71 = vst [vmem:[#allocation2 + $0x50] sm:$0xff] 0.0
      %72 = vst [vmem:[#allocation2 + $0x58] sm:$0xff] 0.0
      %73 = vst [vmem:[#allocation2 + $0x60] sm:$0xff] 0.0
      %74 = vst [vmem:[#allocation2 + $0x68] sm:$0xff] 0.0
      %75 = vst [vmem:[#allocation2 + $0x70] sm:$0xff] 0.0
      %76 = vst [vmem:[#allocation2 + $0x78] sm:$0xff] 0.0
    $region29: #{tpu_custom_call.1} parent=1 // pred_fallthru
      _
    %v77 = vld [vmem:[#allocation2] sm:$0xff]
    %v78 = vld [vmem:[#allocation2 + $0x8] sm:$0xff]
    %v79 = vld [vmem:[#allocation2 + $0x10] sm:$0xff]
    %v80 = vld [vmem:[#allocation2 + $0x18] sm:$0xff]
    %v81 = vld [vmem:[#allocation2 + $0x20] sm:$0xff]
    %v82 = vld [vmem:[#allocation2 + $0x28] sm:$0xff]
    %v83 = vld [vmem:[#allocation2 + $0x30] sm:$0xff]
    %v84 = vld [vmem:[#allocation2 + $0x38] sm:$0xff]
    %v85 = vld [vmem:[#allocation2 + $0x40] sm:$0xff]
    %v86 = vld [vmem:[#allocation2 + $0x48] sm:$0xff]
    %v87 = vld [vmem:[#allocation2 + $0x50] sm:$0xff]
    %v88 = vld [vmem:[#allocation2 + $0x58] sm:$0xff]
    %v89 = vld [vmem:[#allocation2 + $0x60] sm:$0xff]
    %v90 = vld [vmem:[#allocation2 + $0x68] sm:$0xff]
    %v91 = vld [vmem:[#allocation2 + $0x70] sm:$0xff]
    %v92 = vld [vmem:[#allocation2 + $0x78] sm:$0xff]
    %v93 = vld [vmem:[#allocation3] sm:$0xf]
    %v94 = vld [vmem:[#allocation3 + $0x4] sm:$0xf]
    %v95 = vld [vmem:[#allocation3 + $0x8] sm:$0xf]
    %v96 = vld [vmem:[#allocation3 + $0xc] sm:$0xf]
    %v97 = vld [vmem:[#allocation3 + $0x10] sm:$0xf]
    %v98 = vld [vmem:[#allocation3 + $0x14] sm:$0xf]
    %v99 = vld [vmem:[#allocation3 + $0x18] sm:$0xf]
    %v100 = vld [vmem:[#allocation3 + $0x1c] sm:$0xf]
    %v101 = vld [vmem:[#allocation3 + $0x20] sm:$0xf]
    %v102 = vld [vmem:[#allocation3 + $0x24] sm:$0xf]
    %v103 = vld [vmem:[#allocation3 + $0x28] sm:$0xf]
    %v104 = vld [vmem:[#allocation3 + $0x2c] sm:$0xf]
    %v105 = vld [vmem:[#allocation3 + $0x30] sm:$0xf]
    %v106 = vld [vmem:[#allocation3 + $0x34] sm:$0xf]
    %v107 = vld [vmem:[#allocation3 + $0x38] sm:$0xf]
    %v108 = vld [vmem:[#allocation3 + $0x3c] sm:$0xf]
    %v109 = vld [vmem:[#allocation6] sm:$0xff]
    %v110 = vld [vmem:[#allocation6 + $0x8] sm:$0xff]
    %v111 = vld [vmem:[#allocation6 + $0x10] sm:$0xff]
    %v112 = vld [vmem:[#allocation6 + $0x18] sm:$0xff]
    %v113 = vld [vmem:[#allocation6 + $0x20] sm:$0xff]
    %v114 = vld [vmem:[#allocation6 + $0x28] sm:$0xff]
    %v115 = vld [vmem:[#allocation6 + $0x30] sm:$0xff]
    %v116 = vld [vmem:[#allocation6 + $0x38] sm:$0xff]
    %v117 = vld [vmem:[#allocation6 + $0x40] sm:$0xff]
    %v118 = vld [vmem:[#allocation6 + $0x48] sm:$0xff]
    %v119 = vld [vmem:[#allocation6 + $0x50] sm:$0xff]
    %v120 = vld [vmem:[#allocation6 + $0x58] sm:$0xff]
    %v121 = vld [vmem:[#allocation6 + $0x60] sm:$0xff]
    %v122 = vld [vmem:[#allocation6 + $0x68] sm:$0xff]
    %v123 = vld [vmem:[#allocation6 + $0x70] sm:$0xff]
    %v124 = vld [vmem:[#allocation6 + $0x78] sm:$0xff]
    %v141 = vunpack.c.l.b16 %v93
    %v142 = vunpack.c.l.b16 %v94
    %v143 = vunpack.c.l.b16 %v95
    %v144 = vunpack.c.l.b16 %v96
    %v145 = vunpack.c.l.b16 %v97
    %v146 = vunpack.c.l.b16 %v98
    %v147 = vunpack.c.l.b16 %v99
    %v148 = vunpack.c.l.b16 %v100
    %v149 = vunpack.c.l.b16 %v101
    %v150 = vunpack.c.l.b16 %v102
    %v151 = vunpack.c.l.b16 %v103
    %v152 = vunpack.c.l.b16 %v104
    %v153 = vunpack.c.l.b16 %v105
    %v154 = vunpack.c.l.b16 %v106
    %v155 = vunpack.c.l.b16 %v107
    %v156 = vunpack.c.l.b16 %v108
    %v157 = vpack.c.b16 %v142, %v141
    %v158 = vpack.c.b16 %v144, %v143
    %v159 = vpack.c.b16 %v146, %v145
    %v160 = vpack.c.b16 %v148, %v147
    %v161 = vpack.c.b16 %v150, %v149
    %v162 = vpack.c.b16 %v152, %v151
    %v163 = vpack.c.b16 %v154, %v153
    %v164 = vpack.c.b16 %v156, %v155
    %173 = vmatprep.subr.mxu0 0.0
    %174 = vmatpush1.msra.mxu0 %v124
    %175 = vmatprep.subr.mxu0 0.0
    %176 = vmatpush1.msra.mxu0 %v123
    %177 = vmatprep.subr.mxu0 0.0
    %178 = vmatpush1.msra.mxu0 %v122
    %179 = vmatprep.subr.mxu0 0.0
    %180 = vmatpush1.msra.mxu0 %v121
    %181 = vmatprep.subr.mxu0 0.0
    %182 = vmatpush1.msra.mxu0 %v120
    %183 = vmatprep.subr.mxu0 0.0
    %184 = vmatpush1.msra.mxu0 %v119
    %185 = vmatprep.subr.mxu0 0.0
    %186 = vmatpush1.msra.mxu0 %v118
    %187 = vmatprep.subr.mxu0 0.0
    %188 = vmatpush1.msra.mxu0 %v117
    %189 = vmatprep.subr.mxu0 0.0
    %190 = vmatpush1.msra.mxu0 %v116
    %191 = vmatprep.subr.mxu0 0.0
    %192 = vmatpush1.msra.mxu0 %v115
    %193 = vmatprep.subr.mxu0 0.0
    %194 = vmatpush1.msra.mxu0 %v114
    %195 = vmatprep.subr.mxu0 0.0
    %196 = vmatpush1.msra.mxu0 %v113
    %197 = vmatprep.subr.mxu0 0.0
    %198 = vmatpush1.msra.mxu0 %v112
    %199 = vmatprep.subr.mxu0 0.0
    %200 = vmatpush1.msra.mxu0 %v111
    %201 = vmatprep.subr.mxu0 0.0
    %202 = vmatpush1.msra.mxu0 %v110
    %203 = vmatprep.subr.mxu0 0.0
    %204 = vmatpush1.msra.mxu0 %v109
    %205 = vmatprep.subr.mxu0 0.0
    %206 = vmatpush2.msra.mxu0 0.0
    %207 = vmatprep.subr.mxu0 0.0
    %208 = vmatpush2.msra.mxu0 0.0
    %209 = vmatprep.subr.mxu0 0.0
    %210 = vmatpush2.msra.mxu0 0.0
    %211 = vmatprep.subr.mxu0 0.0
    %212 = vmatpush2.msra.mxu0 0.0
    %213 = vmatprep.subr.mxu0 0.0
    %214 = vmatpush2.msra.mxu0 0.0
    %215 = vmatprep.subr.mxu0 0.0
    %216 = vmatpush2.msra.mxu0 0.0
    %217 = vmatprep.subr.mxu0 0.0
    %218 = vmatpush2.msra.mxu0 0.0
    %219 = vmatprep.subr.mxu0 0.0
    %220 = vmatpush2.msra.mxu0 0.0
    %221 = vmatprep.subr.mxu0 0.0
    %222 = vmatpush2.msra.mxu0 0.0
    %223 = vmatprep.subr.mxu0 0.0
    %224 = vmatpush2.msra.mxu0 0.0
    %225 = vmatprep.subr.mxu0 0.0
    %226 = vmatpush2.msra.mxu0 0.0
    %227 = vmatprep.subr.mxu0 0.0
    %228 = vmatpush2.msra.mxu0 0.0
    %229 = vmatprep.subr.mxu0 0.0
    %230 = vmatpush2.msra.mxu0 0.0
    %231 = vmatprep.subr.mxu0 0.0
    %232 = vmatpush2.msra.mxu0 0.0
    %233 = vmatprep.subr.mxu0 0.0
    %234 = vmatpush2.msra.mxu0 0.0
    %235 = vmatprep.subr.mxu0 0.0
    %236 = vmatpush2.msra.mxu0 0.0
    %237 = vmatprep.mubr.bf16.mxu0 0
    %238 = vmatmul.mubr.bf16.gmra.mxu0 %v157
    %v239 = vpop.f32.mrf.mxu0
    %v240 = vadd.f32 0.0, %v239
    %v241 = vpop.f32.mrf.mxu0
    %v242 = vpop.f32.mrf.mxu0
    %v243 = vadd.f32 0.0, %v242
    %v244 = vpop.f32.mrf.mxu0
    %245 = vmatprep.mubr.bf16.mxu0 0
    %246 = vmatmul.mubr.bf16.gmra.mxu0 %v158
    %v247 = vpop.f32.mrf.mxu0
    %v248 = vadd.f32 0.0, %v247
    %v249 = vpop.f32.mrf.mxu0
    %v250 = vpop.f32.mrf.mxu0
    %v251 = vadd.f32 0.0, %v250
    %v252 = vpop.f32.mrf.mxu0
    %253 = vmatprep.mubr.bf16.mxu0 0
    %254 = vmatmul.mubr.bf16.gmra.mxu0 %v159
    %v255 = vpop.f32.mrf.mxu0
    %v256 = vadd.f32 0.0, %v255
    %v257 = vpop.f32.mrf.mxu0
    %v258 = vpop.f32.mrf.mxu0
    %v259 = vadd.f32 0.0, %v258
    %v260 = vpop.f32.mrf.mxu0
    %261 = vmatprep.mubr.bf16.mxu0 0
    %262 = vmatmul.mubr.bf16.gmra.mxu0 %v160
    %v263 = vpop.f32.mrf.mxu0
    %v264 = vadd.f32 0.0, %v263
    %v265 = vpop.f32.mrf.mxu0
    %v266 = vpop.f32.mrf.mxu0
    %v267 = vadd.f32 0.0, %v266
    %v268 = vpop.f32.mrf.mxu0
    %269 = vmatprep.mubr.bf16.mxu0 0
    %270 = vmatmul.mubr.bf16.gmra.mxu0 %v161
    %v271 = vpop.f32.mrf.mxu0
    %v272 = vadd.f32 0.0, %v271
    %v273 = vpop.f32.mrf.mxu0
    %v274 = vpop.f32.mrf.mxu0
    %v275 = vadd.f32 0.0, %v274
    %v276 = vpop.f32.mrf.mxu0
    %277 = vmatprep.mubr.bf16.mxu0 0
    %278 = vmatmul.mubr.bf16.gmra.mxu0 %v162
    %v279 = vpop.f32.mrf.mxu0
    %v280 = vadd.f32 0.0, %v279
    %v281 = vpop.f32.mrf.mxu0
    %v282 = vpop.f32.mrf.mxu0
    %v283 = vadd.f32 0.0, %v282
    %v284 = vpop.f32.mrf.mxu0
    %285 = vmatprep.mubr.bf16.mxu0 0
    %286 = vmatmul.mubr.bf16.gmra.mxu0 %v163
    %v287 = vpop.f32.mrf.mxu0
    %v288 = vadd.f32 0.0, %v287
    %v289 = vpop.f32.mrf.mxu0
    %v290 = vpop.f32.mrf.mxu0
    %v291 = vadd.f32 0.0, %v290
    %v292 = vpop.f32.mrf.mxu0
    %293 = vmatprep.mubr.bf16.mxu0 0
    %294 = vmatmul.mubr.bf16.gmra.mxu0 %v164
    %v295 = vpop.f32.mrf.mxu0
    %v296 = vadd.f32 0.0, %v295
    %v297 = vpop.f32.mrf.mxu0
    %v298 = vpop.f32.mrf.mxu0
    %v299 = vadd.f32 0.0, %v298
    %v300 = vpop.f32.mrf.mxu0
    %301 = vdwg.mxu0
    %v302 = vadd.f32 %v77, %v240
    %v303 = vadd.f32 %v78, %v243
    %v304 = vadd.f32 %v79, %v248
    %v305 = vadd.f32 %v80, %v251
    %v306 = vadd.f32 %v81, %v256
    %v307 = vadd.f32 %v82, %v259
    %v308 = vadd.f32 %v83, %v264
    %v309 = vadd.f32 %v84, %v267
    %v310 = vadd.f32 %v85, %v272
    %v311 = vadd.f32 %v86, %v275
    %v312 = vadd.f32 %v87, %v280
    %v313 = vadd.f32 %v88, %v283
    %v314 = vadd.f32 %v89, %v288
    %v315 = vadd.f32 %v90, %v291
    %v316 = vadd.f32 %v91, %v296
    %v317 = vadd.f32 %v92, %v299
    %318 = vst [vmem:[#allocation2] sm:$0xff] %v302
    %319 = vst [vmem:[#allocation2 + $0x8] sm:$0xff] %v303
    %320 = vst [vmem:[#allocation2 + $0x10] sm:$0xff] %v304
    %321 = vst [vmem:[#allocation2 + $0x18] sm:$0xff] %v305
    %322 = vst [vmem:[#allocation2 + $0x20] sm:$0xff] %v306
    %323 = vst [vmem:[#allocation2 + $0x28] sm:$0xff] %v307
    %324 = vst [vmem:[#allocation2 + $0x30] sm:$0xff] %v308
    %325 = vst [vmem:[#allocation2 + $0x38] sm:$0xff] %v309
    %326 = vst [vmem:[#allocation2 + $0x40] sm:$0xff] %v310
    %327 = vst [vmem:[#allocation2 + $0x48] sm:$0xff] %v311
    %328 = vst [vmem:[#allocation2 + $0x50] sm:$0xff] %v312
    %329 = vst [vmem:[#allocation2 + $0x58] sm:$0xff] %v313
    %330 = vst [vmem:[#allocation2 + $0x60] sm:$0xff] %v314
    %331 = vst [vmem:[#allocation2 + $0x68] sm:$0xff] %v315
    %332 = vst [vmem:[#allocation2 + $0x70] sm:$0xff] %v316
    %333 = vst [vmem:[#allocation2 + $0x78] sm:$0xff] %v317
    // Predicated region
    $region30: #{tpu_custom_call.1} parent=1 // pred_check
      %p334 = pneg %p57
    $region31: #{tpu_custom_call.1} parent=1 // pred_check_branch
      %336 = sbr.rel (%p334) target = $region33
    $region32: #{tpu_custom_call.1} parent=1 // pred_region
      %v337 = vld [vmem:[#allocation2] sm:$0xff]
      %v338 = vld [vmem:[#allocation2 + $0x8] sm:$0xff]
      %v339 = vld [vmem:[#allocation2 + $0x10] sm:$0xff]
      %v340 = vld [vmem:[#allocation2 + $0x18] sm:$0xff]
      %v341 = vld [vmem:[#allocation2 + $0x20] sm:$0xff]
      %v342 = vld [vmem:[#allocation2 + $0x28] sm:$0xff]
      %v343 = vld [vmem:[#allocation2 + $0x30] sm:$0xff]
      %v344 = vld [vmem:[#allocation2 + $0x38] sm:$0xff]
      %v345 = vld [vmem:[#allocation2 + $0x40] sm:$0xff]
      %v346 = vld [vmem:[#allocation2 + $0x48] sm:$0xff]
      %v347 = vld [vmem:[#allocation2 + $0x50] sm:$0xff]
      %v348 = vld [vmem:[#allocation2 + $0x58] sm:$0xff]
      %v349 = vld [vmem:[#allocation2 + $0x60] sm:$0xff]
      %v350 = vld [vmem:[#allocation2 + $0x68] sm:$0xff]
      %v351 = vld [vmem:[#allocation2 + $0x70] sm:$0xff]
      %v352 = vld [vmem:[#allocation2 + $0x78] sm:$0xff]
      %v353 = vld [vmem:[#allocation8] sm:$0xff]
      %v354 = vld [vmem:[#allocation8 + $0x8] sm:$0xff]
      %v355 = vld [vmem:[#allocation8 + $0x10] sm:$0xff]
      %v356 = vld [vmem:[#allocation8 + $0x18] sm:$0xff]
      %v357 = vld [vmem:[#allocation8 + $0x20] sm:$0xff]
      %v358 = vld [vmem:[#allocation8 + $0x28] sm:$0xff]
      %v359 = vld [vmem:[#allocation8 + $0x30] sm:$0xff]
      %v360 = vld [vmem:[#allocation8 + $0x38] sm:$0xff]
      %v361 = vld [vmem:[#allocation8 + $0x40] sm:$0xff]
      %v362 = vld [vmem:[#allocation8 + $0x48] sm:$0xff]
      %v363 = vld [vmem:[#allocation8 + $0x50] sm:$0xff]
      %v364 = vld [vmem:[#allocation8 + $0x58] sm:$0xff]
      %v365 = vld [vmem:[#allocation8 + $0x60] sm:$0xff]
      %v366 = vld [vmem:[#allocation8 + $0x68] sm:$0xff]
      %v367 = vld [vmem:[#allocation8 + $0x70] sm:$0xff]
      %v368 = vld [vmem:[#allocation8 + $0x78] sm:$0xff]
      %369 = vmatprep.subr.mxu0 0.0
      %370 = vmatpush1.msra.mxu0 %v368
      %371 = vmatprep.subr.mxu0 0.0
      %372 = vmatpush1.msra.mxu0 %v367
      %373 = vmatprep.subr.mxu0 0.0
      %374 = vmatpush1.msra.mxu0 %v366
      %375 = vmatprep.subr.mxu0 0.0
      %376 = vmatpush1.msra.mxu0 %v365
      %377 = vmatprep.subr.mxu0 0.0
      %378 = vmatpush1.msra.mxu0 %v364
      %379 = vmatprep.subr.mxu0 0.0
      %380 = vmatpush1.msra.mxu0 %v363
      %381 = vmatprep.subr.mxu0 0.0
      %382 = vmatpush1.msra.mxu0 %v362
      %383 = vmatprep.subr.mxu0 0.0
      %384 = vmatpush1.msra.mxu0 %v361
      %385 = vmatprep.subr.mxu0 0.0
      %386 = vmatpush1.msra.mxu0 %v360
      %387 = vmatprep.subr.mxu0 0.0
      %388 = vmatpush1.msra.mxu0 %v359
      %389 = vmatprep.subr.mxu0 0.0
      %390 = vmatpush1.msra.mxu0 %v358
      %391 = vmatprep.subr.mxu0 0.0
      %392 = vmatpush1.msra.mxu0 %v357
      %393 = vmatprep.subr.mxu0 0.0
      %394 = vmatpush1.msra.mxu0 %v356
      %395 = vmatprep.subr.mxu0 0.0
      %396 = vmatpush1.msra.mxu0 %v355
      %397 = vmatprep.subr.mxu0 0.0
      %398 = vmatpush1.msra.mxu0 %v354
      %399 = vmatprep.subr.mxu0 0.0
      %400 = vmatpush1.msra.mxu0 %v353
      %401 = vmatprep.subr.mxu0 0.0
      %402 = vmatpush2.msra.mxu0 0.0
      %403 = vmatprep.subr.mxu0 0.0
      %404 = vmatpush2.msra.mxu0 0.0
      %405 = vmatprep.subr.mxu0 0.0
      %406 = vmatpush2.msra.mxu0 0.0
      %407 = vmatprep.subr.mxu0 0.0
      %408 = vmatpush2.msra.mxu0 0.0
      %409 = vmatprep.subr.mxu0 0.0
      %410 = vmatpush2.msra.mxu0 0.0
      %411 = vmatprep.subr.mxu0 0.0
      %412 = vmatpush2.msra.mxu0 0.0
      %413 = vmatprep.subr.mxu0 0.0
      %414 = vmatpush2.msra.mxu0 0.0
      %415 = vmatprep.subr.mxu0 0.0
      %416 = vmatpush2.msra.mxu0 0.0
      %417 = vmatprep.subr.mxu0 0.0
      %418 = vmatpush2.msra.mxu0 0.0
      %419 = vmatprep.subr.mxu0 0.0
      %420 = vmatpush2.msra.mxu0 0.0
      %421 = vmatprep.subr.mxu0 0.0
      %422 = vmatpush2.msra.mxu0 0.0
      %423 = vmatprep.subr.mxu0 0.0
      %424 = vmatpush2.msra.mxu0 0.0
      %425 = vmatprep.subr.mxu0 0.0
      %426 = vmatpush2.msra.mxu0 0.0
      %427 = vmatprep.subr.mxu0 0.0
      %428 = vmatpush2.msra.mxu0 0.0
      %429 = vmatprep.subr.mxu0 0.0
      %430 = vmatpush2.msra.mxu0 0.0
      %431 = vmatprep.subr.mxu0 0.0
      %432 = vmatpush2.msra.mxu0 0.0
      %433 = vmatprep.mubr.f32.mxu0 0.0
      %434 = vmatmul.mubr.f32.gmra.mxu0 %v337
      %v435 = vpop.f32.mrf.mxu0
      %v436 = vadd.f32 0.0, %v435
      %v437 = vpop.f32.mrf.mxu0
      %438 = vmatprep.mubr.f32.mxu0 0.0
      %439 = vmatmul.mubr.f32.gmra.mxu0 %v338
      %v440 = vpop.f32.mrf.mxu0
      %v441 = vadd.f32 0.0, %v440
      %v442 = vpop.f32.mrf.mxu0
      %443 = vmatprep.mubr.f32.mxu0 0.0
      %444 = vmatmul.mubr.f32.gmra.mxu0 %v339
      %v445 = vpop.f32.mrf.mxu0
      %v446 = vadd.f32 0.0, %v445
      %v447 = vpop.f32.mrf.mxu0
      %448 = vmatprep.mubr.f32.mxu0 0.0
      %449 = vmatmul.mubr.f32.gmra.mxu0 %v340
      %v450 = vpop.f32.mrf.mxu0
      %v451 = vadd.f32 0.0, %v450
      %v452 = vpop.f32.mrf.mxu0
      %453 = vmatprep.mubr.f32.mxu0 0.0
      %454 = vmatmul.mubr.f32.gmra.mxu0 %v341
      %v455 = vpop.f32.mrf.mxu0
      %v456 = vadd.f32 0.0, %v455
      %v457 = vpop.f32.mrf.mxu0
      %458 = vmatprep.mubr.f32.mxu0 0.0
      %459 = vmatmul.mubr.f32.gmra.mxu0 %v342
      %v460 = vpop.f32.mrf.mxu0
      %v461 = vadd.f32 0.0, %v460
      %v462 = vpop.f32.mrf.mxu0
      %463 = vmatprep.mubr.f32.mxu0 0.0
      %464 = vmatmul.mubr.f32.gmra.mxu0 %v343
      %v465 = vpop.f32.mrf.mxu0
      %v466 = vadd.f32 0.0, %v465
      %v467 = vpop.f32.mrf.mxu0
      %468 = vmatprep.mubr.f32.mxu0 0.0
      %469 = vmatmul.mubr.f32.gmra.mxu0 %v344
      %v470 = vpop.f32.mrf.mxu0
      %v471 = vadd.f32 0.0, %v470
      %v472 = vpop.f32.mrf.mxu0
      %473 = vmatprep.mubr.f32.mxu0 0.0
      %474 = vmatmul.mubr.f32.gmra.mxu0 %v345
      %v475 = vpop.f32.mrf.mxu0
      %v476 = vadd.f32 0.0, %v475
      %v477 = vpop.f32.mrf.mxu0
      %478 = vmatprep.mubr.f32.mxu0 0.0
      %479 = vmatmul.mubr.f32.gmra.mxu0 %v346
      %v480 = vpop.f32.mrf.mxu0
      %v481 = vadd.f32 0.0, %v480
      %v482 = vpop.f32.mrf.mxu0
      %483 = vmatprep.mubr.f32.mxu0 0.0
      %484 = vmatmul.mubr.f32.gmra.mxu0 %v347
      %v485 = vpop.f32.mrf.mxu0
      %v486 = vadd.f32 0.0, %v485
      %v487 = vpop.f32.mrf.mxu0
      %488 = vmatprep.mubr.f32.mxu0 0.0
      %489 = vmatmul.mubr.f32.gmra.mxu0 %v348
      %v490 = vpop.f32.mrf.mxu0
      %v491 = vadd.f32 0.0, %v490
      %v492 = vpop.f32.mrf.mxu0
      %493 = vmatprep.mubr.f32.mxu0 0.0
      %494 = vmatmul.mubr.f32.gmra.mxu0 %v349
      %v495 = vpop.f32.mrf.mxu0
      %v496 = vadd.f32 0.0, %v495
      %v497 = vpop.f32.mrf.mxu0
      %498 = vmatprep.mubr.f32.mxu0 0.0
      %499 = vmatmul.mubr.f32.gmra.mxu0 %v350
      %v500 = vpop.f32.mrf.mxu0
      %v501 = vadd.f32 0.0, %v500
      %v502 = vpop.f32.mrf.mxu0
      %503 = vmatprep.mubr.f32.mxu0 0.0
      %504 = vmatmul.mubr.f32.gmra.mxu0 %v351
      %v505 = vpop.f32.mrf.mxu0
      %v506 = vadd.f32 0.0, %v505
      %v507 = vpop.f32.mrf.mxu0
      %508 = vmatprep.mubr.f32.mxu0 0.0
      %509 = vmatmul.mubr.f32.gmra.mxu0 %v352
      %v510 = vpop.f32.mrf.mxu0
      %v511 = vadd.f32 0.0, %v510
      %v512 = vpop.f32.mrf.mxu0
      %513 = vdwg.mxu0
      %514 = vst [vmem:[#allocation9] sm:$0xff] %v436
      %515 = vst [vmem:[#allocation9 + $0x8] sm:$0xff] %v441
      %516 = vst [vmem:[#allocation9 + $0x10] sm:$0xff] %v446
      %517 = vst [vmem:[#allocation9 + $0x18] sm:$0xff] %v451
      %518 = vst [vmem:[#allocation9 + $0x20] sm:$0xff] %v456
      %519 = vst [vmem:[#allocation9 + $0x28] sm:$0xff] %v461
      %520 = vst [vmem:[#allocation9 + $0x30] sm:$0xff] %v466
      %521 = vst [vmem:[#allocation9 + $0x38] sm:$0xff] %v471
      %522 = vst [vmem:[#allocation9 + $0x40] sm:$0xff] %v476
      %523 = vst [vmem:[#allocation9 + $0x48] sm:$0xff] %v481
      %524 = vst [vmem:[#allocation9 + $0x50] sm:$0xff] %v486
      %525 = vst [vmem:[#allocation9 + $0x58] sm:$0xff] %v491
      %526 = vst [vmem:[#allocation9 + $0x60] sm:$0xff] %v496
      %527 = vst [vmem:[#allocation9 + $0x68] sm:$0xff] %v501
      %528 = vst [vmem:[#allocation9 + $0x70] sm:$0xff] %v506
      %529 = vst [vmem:[#allocation9 + $0x78] sm:$0xff] %v511
    $region33: #{tpu_custom_call.1} parent=1 // pred_fallthru
      _
    // Predicated region
    $region34: #{tpu_custom_call.1} parent=1 // pred_check
      _
    $region35: #{tpu_custom_call.1} parent=1 // pred_check_branch
      %531 = sbr.rel (0) target = $region37
    $region36: #{tpu_custom_call.1} parent=1 // pred_region
      %s533 = ssub.s32 2048, 2048
      %534 = vsyncadd [#allocation5], %s533
      %s535 = sshll.u32 [#allocation9], 4
      %s536 = int_to_ptr.vmem [resolvable:$true] %s535
      %541 = dma.vmem_to_hbm [thread:$0]  %s536, 2048, %s3, [#allocation5], 128, 128, 8
    $region37: #{tpu_custom_call.1} parent=1 // pred_fallthru
      _
    // Predicated region
    $region38: #{tpu_custom_call.1} parent=1 // pred_check
      _
    $region39: #{tpu_custom_call.1} parent=1 // pred_check_branch
      %543 = sbr.rel (0) target = $region41
    $region40: #{tpu_custom_call.1} parent=1 // pred_region
      %544 = dma.done [#allocation5], 2048
    $region41: #{tpu_custom_call.1} parent=1 // pred_fallthru
      _
    %545 = vsyncpa [#allocation4], 1
    %546 = vsyncpa [#allocation7], 1
    %547 = vsyncpa [#allocation5], 1

</llo_original>
